<compile_context>
chip_gen: v5e
topology: v5e:2x2
jax: 0.10.0
libtpu: 0.0.40
codegen_flags: <defaults>
</compile_context>

<pallas_src>
import math
import functools

import jax
import jax.numpy as jnp
from jax import lax
from jax.experimental import pallas as pl
from jax.experimental.pallas import tpu as pltpu


def _round_up(x: int, m: int) -> int:
    return ((x + m - 1) // m) * m


def make_positional_encoding(max_len: int, embedding_dim: int) -> jnp.ndarray:
    """Sinusoidal positional encoding, shape (max_len, embedding_dim)."""
    assert embedding_dim % 2 == 0, "embedding_dim must be even"
    position = jnp.arange(max_len, dtype=jnp.float32)[:, None]               # (L, 1)
    div_term = jnp.exp(
        jnp.arange(0, embedding_dim, 2, dtype=jnp.float32)
        * (-math.log(10000.0) / embedding_dim)
    )                                                                         # (D/2,)
    angles = position * div_term                                              # (L, D/2)
    pe = jnp.zeros((max_len, embedding_dim), dtype=jnp.float32)
    pe = pe.at[:, 0::2].set(jnp.sin(angles))
    pe = pe.at[:, 1::2].set(jnp.cos(angles))
    return pe


def _vmem_capacity_bytes() -> int:
    """Physical VMEM of the current chip; conservative fallback if unknown."""
    try:
        info = pltpu.get_tpu_info()
        cap = getattr(info, "vmem_capacity_bytes", None)
        if cap:
            return int(cap)
    except Exception:
        pass
    return 64 * 1024 * 1024   # v7x per-core size — safe lower bound everywhere


# --------------------------------------------------------------------------
# Path A: table resident in VMEM, gather-as-one-hot bf16 MXU matmul.
# --------------------------------------------------------------------------
def _embed_resident_kernel(ids_ref, mask_ref, pe_ref, emb_ref, out_ref, *,
                           scale, ts, pe_tiles, compute_dtype):
    # ids_ref : (TS, 1) int32      token ids for this token tile
    # mask_ref: (TS, 1) f32        attention mask for this token tile
    # pe_ref  : (S_pad, D) or (TS, D) f32   positional encoding
    # emb_ref : (V_pad, D) compute_dtype    full embedding table (resident)
    # out_ref : (TS, D)            output tile
    i = pl.program_id(0)

    ids = ids_ref[...]                                           # (TS, 1)
    v_pad = emb_ref.shape[0]
    col = lax.broadcasted_iota(jnp.int32, (ts, v_pad), 1)        # (TS, V_pad)
    onehot = (ids == col).astype(compute_dtype)                  # exact 0/1
    rows = jnp.dot(onehot, emb_ref[...],
                   preferred_element_type=jnp.float32)           # (TS, D) f32

    if pe_tiles == 1:
        pos = pe_ref[...]                                        # (TS, D)
    else:
        start = pl.multiple_of((i % pe_tiles) * ts, 8)
        pos = pe_ref[pl.ds(start, ts), :]                        # (TS, D)

    out_ref[...] = ((rows * scale + pos) * mask_ref[...]).astype(out_ref.dtype)


# --------------------------------------------------------------------------
# Path B: table in HBM, per-row DMA gather with scalar-prefetched ids (P4).
# --------------------------------------------------------------------------
def _embed_gather_kernel(ids_smem, mask_ref, pe_ref, table_hbm, out_ref,
                         rows_vmem, sem, *, scale, ts, pe_tiles):
    # ids_smem : (num_tokens,) int32 in SMEM (scalar prefetch)
    # table_hbm: (V, D) HBM ref (memory_space=pl.ANY)
    # rows_vmem: (2, TS, D) VMEM scratch (double buffer)
    # sem      : DMA semaphores, shape (2,)
    i = pl.program_id(0)
    n = pl.num_programs(0)
    slot = lax.rem(i, 2)

    def issue_tile(tile_idx, slot_idx):
        base = tile_idx * ts

        def body(t, carry):
            tok = ids_smem[base + t]
            pltpu.make_async_copy(table_hbm.at[pl.ds(tok, 1)],
                                  rows_vmem.at[slot_idx, pl.ds(t, 1)],
                                  sem.at[slot_idx]).start()
            return carry

        lax.fori_loop(0, ts, body, 0)

    @pl.when(i == 0)
    def _():
        issue_tile(0, 0)                 # prime slot 0 with the first tile

    @pl.when(i + 1 < n)
    def _():
        issue_tile(i + 1, 1 - slot)      # prefetch next tile into other slot

    def wait_body(t, carry):
        pltpu.make_async_copy(table_hbm.at[pl.ds(0, 1)],
                              rows_vmem.at[slot, pl.ds(0, 1)],
                              sem.at[slot]).wait()
        return carry

    lax.fori_loop(0, ts, wait_body, 0)   # wait for this tile's TS row copies

    rows = rows_vmem[slot].astype(jnp.float32)                   # (TS, D)

    if pe_tiles == 1:
        pos = pe_ref[...]
    else:
        start = pl.multiple_of((i % pe_tiles) * ts, 8)
        pos = pe_ref[pl.ds(start, ts), :]

    out_ref[...] = ((rows * scale + pos) * mask_ref[...]).astype(out_ref.dtype)


# --------------------------------------------------------------------------
# Wrapper
# --------------------------------------------------------------------------
def embedding_forward(token_ids, embedding_table, pos_encoding,
                      attention_mask=None, *,
                      out_dtype=jnp.float32,
                      table_compute_dtype=jnp.bfloat16,
                      force_gather=False):
    """
    token_ids:       (B, S) int32
    embedding_table: (V, D) float32
    pos_encoding:    (max_len, D) float32, max_len >= S
    attention_mask:  optional (B, S) float
    returns:         (B, S, D) out_dtype
    """
    B, S = token_ids.shape
    V, D = embedding_table.shape
    max_len = pos_encoding.shape[0]
    assert S <= max_len, "sequence length exceeds max_len of positional encoding"
    scale = math.sqrt(float(D))

    if attention_mask is None:
        attention_mask = jnp.ones((B, S), dtype=jnp.float32)
    attention_mask = attention_mask.astype(jnp.float32)
    token_ids = token_ids.astype(jnp.int32)

    vmem_cap = _vmem_capacity_bytes()

    # ---- token tiling: decouple TS from S (pad S up) ----------------------
    TS_TARGET = 256
    S_pad = _round_up(S, 8)
    if S_pad >= TS_TARGET:
        TS = TS_TARGET
        S_pad = _round_up(S_pad, TS)
    else:
        TS = S_pad
        # Keep >= 2 token tiles on the parallel axis when possible (v7x 2 TCs).
        if B == 1 and TS % 16 == 0:
            TS //= 2

    tiles_per_seq = S_pad // TS
    num_tokens = B * S_pad
    num_token_tiles = num_tokens // TS

    pe = pos_encoding[:S].astype(jnp.float32)
    if S_pad != S:
        pad = S_pad - S
        token_ids = jnp.pad(token_ids, ((0, 0), (0, pad)))           # id 0 (valid)
        attention_mask = jnp.pad(attention_mask, ((0, 0), (0, pad)))  # mask 0
        pe = jnp.pad(pe, ((0, pad), (0, 0)))

    ids_flat = token_ids.reshape(num_tokens, 1)
    ids_1d = token_ids.reshape(num_tokens)
    mask_flat = attention_mask.reshape(num_tokens, 1)

    # ---- positional encoding residency ------------------------------------
    pe_bytes = S_pad * D * 4
    pe_resident = pe_bytes <= vmem_cap // 16
    if pe_resident:
        pe_block = (S_pad, D)        # one resident block, constant index map
        pe_tiles = tiles_per_seq
    else:
        pe_block = (TS, D)           # streamed per token tile (huge PE only)
        pe_tiles = 1

    out_elt = jnp.dtype(out_dtype).itemsize
    io_bytes = 2 * (TS * 4) * 2 + 2 * TS * D * out_elt       # ids+mask, out (x2 bufs)
    pe_buf_bytes = (pe_bytes if pe_resident else TS * D * 4) * 2

    # ---- path selection (VMEM-budget-derived, generation aware) -----------
    V_pad = _round_up(V, 128)
    table_elt = jnp.dtype(table_compute_dtype).itemsize
    table_resident_bytes = V_pad * D * table_elt
    table_budget = vmem_cap // 8          # ~8 MiB on v7x, ~16 MiB on v5e/v6e
    use_resident = (not force_gather) and (table_resident_bytes <= table_budget)

    if use_resident:
        # ----------------- Path A: VMEM-resident table ---------------------
        table = embedding_table.astype(table_compute_dtype)
        if V_pad != V:
            table = jnp.pad(table, ((0, V_pad - V), (0, 0)))

        onehot_bytes = TS * V_pad * table_elt
        # TODO(synk): pipeline_mode=pl.Buffered(1) on the table/PE BlockSpecs
        # would halve their VMEM cost (constant block index); budget assumes
        # default double buffering instead.
        est = 2 * table_resident_bytes + pe_buf_bytes + io_bytes + onehot_bytes
        vmem_limit = min(int(est * 1.5) + (8 << 20), int(vmem_cap * 0.85))

        kernel = functools.partial(
            _embed_resident_kernel, scale=scale, ts=TS, pe_tiles=pe_tiles,
            compute_dtype=table_compute_dtype)

        pe_idx = ((lambda i: (0, 0)) if pe_resident
                  else (lambda i: (i % tiles_per_seq, 0)))

        grid_spec = pltpu.PrefetchScalarGridSpec(
            num_scalar_prefetch=0,
            grid=(num_token_tiles,),
            in_specs=[
                pl.BlockSpec((TS, 1), lambda i: (i, 0)),      # token ids
                pl.BlockSpec((TS, 1), lambda i: (i, 0)),      # attention mask
                pl.BlockSpec(pe_block, pe_idx),               # positional enc
                pl.BlockSpec((V_pad, D), lambda i: (0, 0)),   # whole table
            ],
            out_specs=pl.BlockSpec((TS, D), lambda i: (i, 0)),
        )
        out = pl.pallas_call(
            kernel,
            grid_spec=grid_spec,
            out_shape=jax.ShapeDtypeStruct((num_tokens, D), out_dtype),
            compiler_params=pltpu.CompilerParams(
                dimension_semantics=("parallel",),
                vmem_limit_bytes=vmem_limit),
        )(ids_flat, mask_flat, pe, table)
    else:
        # ----------------- Path B: HBM table + DMA gather ------------------
        table = embedding_table                     # keep original (f32) rows
        rows_bytes = 2 * TS * D * jnp.dtype(table.dtype).itemsize
        est = rows_bytes + pe_buf_bytes + io_bytes
        vmem_limit = min(int(est * 1.5) + (8 << 20), int(vmem_cap * 0.85))

        kernel = functools.partial(
            _embed_gather_kernel, scale=scale, ts=TS, pe_tiles=pe_tiles)

        pe_idx = ((lambda i, ids: (0, 0)) if pe_resident
                  else (lambda i, ids: (i % tiles_per_seq, 0)))

        grid_spec = pltpu.PrefetchScalarGridSpec(
            num_scalar_prefetch=1,                  # token ids -> SMEM
            grid=(num_token_tiles,),
            in_specs=[
                pl.BlockSpec((TS, 1), lambda i, ids: (i, 0)),   # attention mask
                pl.BlockSpec(pe_block, pe_idx),                  # positional enc
                pl.BlockSpec(memory_space=pl.ANY),               # table in HBM
            ],
            out_specs=pl.BlockSpec((TS, D), lambda i, ids: (i, 0)),
            scratch_shapes=[
                pltpu.VMEM((2, TS, D), table.dtype),   # double-buffered rows
                pltpu.SemaphoreType.DMA((2,)),
            ],
        )
        out = pl.pallas_call(
            kernel,
            grid_spec=grid_spec,
            out_shape=jax.ShapeDtypeStruct((num_tokens, D), out_dtype),
            compiler_params=pltpu.CompilerParams(
                dimension_semantics=("arbitrary",),   # manual cross-step DMAs
                vmem_limit_bytes=vmem_limit),
        )(ids_1d, mask_flat, pe, table)

    out = out.reshape(B, S_pad, D)
    if S_pad != S:
        out = out[:, :S, :]
    return out


if __name__ == "__main__":
    # Small, deterministic config consistent with the module's constructor.
    vocab_size = 64
    embedding_dim = 128     # lane-dense last dim
    max_len = 16
    batch = 2
    seq = 8

    key = jax.random.PRNGKey(0)
    k_tab, k_ids, k_mask = jax.random.split(key, 3)

    embedding_table = jax.random.normal(k_tab, (vocab_size, embedding_dim),
                                        dtype=jnp.float32)
    pos_encoding = make_positional_encoding(max_len, embedding_dim)
    token_ids = jax.random.randint(k_ids, (batch, seq), 0, vocab_size,
                                   dtype=jnp.int32)
    attention_mask = (jax.random.uniform(k_mask, (batch, seq)) > 0.2
                      ).astype(jnp.float32)

    scale = math.sqrt(float(embedding_dim))

    # Path A: VMEM-resident table (bf16 MXU one-hot gather) — default path.
    out_res = embedding_forward(token_ids, embedding_table, pos_encoding,
                                attention_mask)
    out_res = jax.block_until_ready(out_res)
    tab_bf16 = embedding_table.astype(jnp.bfloat16).astype(jnp.float32)
    ref_res = (jnp.take(tab_bf16, token_ids, axis=0) * scale
               + pos_encoding[None, :seq, :]) * attention_mask[..., None]
    assert out_res.shape == (batch, seq, embedding_dim)
    assert jnp.allclose(out_res, ref_res, atol=1e-4, rtol=1e-4)

    # Path B: HBM table + scalar-prefetched per-row DMA gather (huge-vocab
    # path, forced here at small size to exercise it). Exact f32 gather.
    out_gat = embedding_forward(token_ids, embedding_table, pos_encoding,
                                attention_mask, force_gather=True)
    out_gat = jax.block_until_ready(out_gat)
    ref = (jnp.take(embedding_table, token_ids, axis=0) * scale
           + pos_encoding[None, :seq, :]) * attention_mask[..., None]
    assert jnp.allclose(out_gat, ref, atol=1e-5, rtol=1e-5)

    print("KERNEL_OK")
</pallas_src>

<mosaic_0001>
module attributes {stable_mosaic.version = 11 : i64} {
  func.func @_embed_resident_kernel(%arg0: i32, %arg1: memref<8x1xi32, #tpu.memory_space<vmem>>, %arg2: memref<8x1xf32, #tpu.memory_space<vmem>>, %arg3: memref<8x128xf32, #tpu.memory_space<vmem>>, %arg4: memref<128x128xbf16, #tpu.memory_space<vmem>>, %arg5: memref<8x128xf32, #tpu.memory_space<vmem>>) attributes {dimension_semantics = [#tpu.dimension_semantics<parallel>], iteration_bounds = array<i64: 2>, scalar_prefetch = 0 : i64, scratch_operands = 0 : i64, tpu.core_type = #tpu.core_type<tc>, window_params = [{transform_indices = @transform_0, window_bounds = array<i64: 8, 1>}, {transform_indices = @transform_1, window_bounds = array<i64: 8, 1>}, {pipeline_mode = #tpu.pipeline_mode<synchronous>, transform_indices = @transform_2, window_bounds = array<i64: 8, 128>}, {pipeline_mode = #tpu.pipeline_mode<synchronous>, transform_indices = @transform_3, window_bounds = array<i64: 128, 128>}, {transform_indices = @transform_4, window_bounds = array<i64: 8, 128>}]} {
    %c0 = arith.constant 0 : index
    %c0_0 = arith.constant 0 : index
    %0 = vector.load %arg1[%c0, %c0_0] : memref<8x1xi32, #tpu.memory_space<vmem>>, vector<8x1xi32>
    %1 = tpu.iota {dimensions = array<i32: 1>} : vector<8x128xi32>
    %2 = vector.broadcast %0 : vector<8x1xi32> to vector<8x128xi32>
    %3 = arith.cmpi eq, %2, %1 : vector<8x128xi32>
    %4 = arith.extui %3 : vector<8x128xi1> to vector<8x128xi32>
    %5 = arith.sitofp %4 : vector<8x128xi32> to vector<8x128xf32>
    %6 = arith.truncf %5 : vector<8x128xf32> to vector<8x128xbf16>
    %c0_1 = arith.constant 0 : index
    %c0_2 = arith.constant 0 : index
    %7 = vector.load %arg4[%c0_1, %c0_2] : memref<128x128xbf16, #tpu.memory_space<vmem>>, vector<128x128xbf16>
    %cst = arith.constant dense<0.000000e+00> : vector<8x128xf32>
    %8 = tpu.matmul %6, %7, %cst {dimension_numbers = #tpu.dot_dimension_numbers<[1], [0], [0], [1], [0, 0, 1, 1], [], []>} : vector<8x128xbf16>, vector<128x128xbf16>, vector<8x128xf32> -> vector<8x128xf32>
    %c0_3 = arith.constant 0 : index
    %c0_4 = arith.constant 0 : index
    %9 = vector.load %arg3[%c0_3, %c0_4] : memref<8x128xf32, #tpu.memory_space<vmem>>, vector<8x128xf32>
    %cst_5 = arith.constant 11.3137083 : f32
    %10 = vector.broadcast %cst_5 : f32 to vector<8x128xf32>
    %11 = arith.mulf %8, %10 : vector<8x128xf32>
    %12 = arith.addf %11, %9 : vector<8x128xf32>
    %c0_6 = arith.constant 0 : index
    %c0_7 = arith.constant 0 : index
    %13 = vector.load %arg2[%c0_6, %c0_7] : memref<8x1xf32, #tpu.memory_space<vmem>>, vector<8x1xf32>
    %14 = vector.broadcast %13 : vector<8x1xf32> to vector<8x128xf32>
    %15 = arith.mulf %12, %14 : vector<8x128xf32>
    %c0_8 = arith.constant 0 : index
    %c0_9 = arith.constant 0 : index
    %16 = vector.load %arg5[%c0_8, %c0_9] : memref<8x128xf32, #tpu.memory_space<vmem>>, vector<8x128xf32>
    tpu.vector_store %arg5[%c0_8, %c0_9], %15 {strides = array<i32>} : memref<8x128xf32, #tpu.memory_space<vmem>>, vector<8x128xf32>,
    return
  }
  func.func @transform_0(%arg0: i32) -> (i32, i32) {
    %c0_i32 = arith.constant 0 : i32
    %c0_i32_0 = arith.constant 0 : i32
    return %arg0, %c0_i32 : i32, i32
  }
  func.func @transform_1(%arg0: i32) -> (i32, i32) {
    %c0_i32 = arith.constant 0 : i32
    %c0_i32_0 = arith.constant 0 : i32
    return %arg0, %c0_i32 : i32, i32
  }
  func.func @transform_2(%arg0: i32) -> (i32, i32) {
    %c0_i32 = arith.constant 0 : i32
    %c0_i32_0 = arith.constant 0 : i32
    %c0_i32_1 = arith.constant 0 : i32
    return %c0_i32, %c0_i32_0 : i32, i32
  }
  func.func @transform_3(%arg0: i32) -> (i32, i32) {
    %c0_i32 = arith.constant 0 : i32
    %c0_i32_0 = arith.constant 0 : i32
    %c0_i32_1 = arith.constant 0 : i32
    return %c0_i32, %c0_i32_0 : i32, i32
  }
  func.func @transform_4(%arg0: i32) -> (i32, i32) {
    %c0_i32 = arith.constant 0 : i32
    %c0_i32_0 = arith.constant 0 : i32
    return %arg0, %c0_i32 : i32, i32
  }
}

</mosaic_0001>

<llo_original>
// kernel: tpu_custom_call.1
$region0: #{tpu_custom_call.1}
  #allocation0 [shape = 'u32[]', space=smem, size = 0x4, offset = 0x4, fixed_abs, tag = 'smem constant byte address 0x4 - core index']
  #allocation1 [shape = 'u32[72,128]{1,0:T(1,128)}', space=vmem, size = 0x9000, scoped, tag = 'internal scratch']
  %s0 = inlined_call_operand.vmem [shape: s32[16,1], index: 0, kind: input, shape index: {}]
  %s1 = inlined_call_operand.vmem [shape: f32[16,1], index: 1, kind: input, shape index: {}]
  %s2 = inlined_call_operand.vmem [shape: f32[8,128], index: 2, kind: input, shape index: {}]
  %s3 = inlined_call_operand.hbm [shape: bf16[128,128], index: 3, kind: input, shape index: {}]
  %s4 = inlined_call_operand.hbm [shape: f32[16,128], index: 4, kind: output, shape index: {}]
  %s5 = sld [smem:[#allocation0]]
  $region53: #{tpu_custom_call.1} parent=0
    _
  %s7 = ssub.s32 1, %s5
  %s8 = scalar_select 0, %s7, %s5
  $region1: #{tpu_custom_call.1} parent=0
    #allocation2 [shape = 'u8[32768]{0}', space=vmem, size = 0x8000, scoped, tag = 'input window, operand 3, single buffered']
    #allocation3 [shape = 's32[2]{0}', space=sflag, size = 0x8, scoped, tag = 'scoped memory for tpu_custom_call.1']
    #allocation4 [shape = 's32[2]{0}', space=sflag, size = 0x8, scoped, tag = 'scoped memory for tpu_custom_call.1']
    #allocation5 [shape = 'u8[8192]{0}', space=vmem, size = 0x2000, scoped, tag = 'output window, operand 0']
    %9 = vsyncpa [#allocation3], 0
    %10 = vsyncpa [#allocation4], 0
    %s11 = scalar_lea.sflag [#allocation4], 1
    %12 = vsyncpa %s11, 0
    loop: start=0, step=1, limit=4
    $region2: #{tpu_custom_call.1} parent=1 // loop_pre_header
      _
    $region3: #{tpu_custom_call.1} parent=1 // loop_header
      %s14 = sphi 0, %s18
      %p15 = scmp.ge.s32.totalorder %s14, 4
      %s24 = sphi 0, %s26
      %s27 = sphi 0, %s24
      %s28 = sphi 0, %s27
      %s44 = sphi 0, %s28
      %s50 = sphi 0, %s52
      %s53 = sphi 0, %s50
      %s54 = sphi 0, %s53
      %s70 = sphi 0, %s54
      %s74 = sphi 0, %s74
      %s76 = sphi 0, %s74
      %s77 = sphi 0, %s76
      %s91 = sphi 0, %s77
      %s95 = sphi 0, %s95
      %s97 = sphi 0, %s95
      %s98 = sphi 0, %s97
      %s112 = sphi 0, %s98
      %s118 = sphi 0, %s120
      %s121 = sphi 0, %s118
      %s122 = sphi 0, %s121
      %s138 = sphi 0, %s122
    $region4: #{tpu_custom_call.1} parent=1 // loop_header_branch
      %17 = sbr.rel (%p15) target = $region8
    $region5: #{tpu_custom_call.1} parent=1 // loop_body
      %s19 = ssub.s32 %s14, 1
      %s20 = ssub.s32 %s14, 2
      %s21 = sadd.s32 %s14, 1
      %s22 = ssub.s32 %s14, %s21
      %p23 = scmp.eq.s32.totalorder %s22, 0
      %s25 = sadd.s32 %s24, 1
      %s26 = scalar_select %p23, %s24, %s25
      %p29 = pneg %p23
      %p30 = scmp.eq.s32.totalorder %s14, 1
      %p31 = por %p29, %p30
      %p32 = scmp.ne.s32.totalorder %s24, %s27
      %p33 = scmp.eq.s32.totalorder %s14, 0
      %p34 = por %p32, %p33
      %p35 = scmp.ne.s32.totalorder %s24, %s27
      %p36 = scmp.eq.s32.totalorder %s19, 1
      %p37 = por %p35, %p36
      %p38 = scmp.ne.s32.totalorder %s27, %s28
      %p39 = scmp.eq.s32.totalorder %s19, 0
      %p40 = por %p38, %p39
      %p41 = scmp.ne.s32.totalorder %s27, %s28
      %p42 = scmp.eq.s32.totalorder %s20, 1
      %p43 = por %p41, %p42
      %p45 = scmp.ne.s32.totalorder %s28, %s44
      %p46 = scmp.eq.s32.totalorder %s20, 0
      %p47 = por %p45, %p46
      %s48 = ssub.s32 %s14, %s21
      %p49 = scmp.eq.s32.totalorder %s48, 0
      %s51 = sadd.s32 %s50, 1
      %s52 = scalar_select %p49, %s50, %s51
      %p55 = pneg %p49
      %p56 = scmp.eq.s32.totalorder %s14, 1
      %p57 = por %p55, %p56
      %p58 = scmp.ne.s32.totalorder %s50, %s53
      %p59 = scmp.eq.s32.totalorder %s14, 0
      %p60 = por %p58, %p59
      %p61 = scmp.ne.s32.totalorder %s50, %s53
      %p62 = scmp.eq.s32.totalorder %s19, 1
      %p63 = por %p61, %p62
      %p64 = scmp.ne.s32.totalorder %s53, %s54
      %p65 = scmp.eq.s32.totalorder %s19, 0
      %p66 = por %p64, %p65
      %p67 = scmp.ne.s32.totalorder %s53, %s54
      %p68 = scmp.eq.s32.totalorder %s20, 1
      %p69 = por %p67, %p68
      %p71 = scmp.ne.s32.totalorder %s54, %s70
      %p72 = scmp.eq.s32.totalorder %s20, 0
      %p73 = por %p71, %p72
      %s75 = sadd.s32 %s74, 1
      %p78 = scmp.eq.s32.totalorder %s14, 1
      %p79 = scmp.ne.s32.totalorder %s74, %s76
      %p80 = scmp.eq.s32.totalorder %s14, 0
      %p81 = por %p79, %p80
      %p82 = scmp.ne.s32.totalorder %s74, %s76
      %p83 = scmp.eq.s32.totalorder %s19, 1
      %p84 = por %p82, %p83
      %p85 = scmp.ne.s32.totalorder %s76, %s77
      %p86 = scmp.eq.s32.totalorder %s19, 0
      %p87 = por %p85, %p86
      %p88 = scmp.ne.s32.totalorder %s76, %s77
      %p89 = scmp.eq.s32.totalorder %s20, 1
      %p90 = por %p88, %p89
      %p92 = scmp.ne.s32.totalorder %s77, %s91
      %p93 = scmp.eq.s32.totalorder %s20, 0
      %p94 = por %p92, %p93
      %s96 = sadd.s32 %s95, 1
      %p99 = scmp.eq.s32.totalorder %s14, 1
      %p100 = scmp.ne.s32.totalorder %s95, %s97
      %p101 = scmp.eq.s32.totalorder %s14, 0
      %p102 = por %p100, %p101
      %p103 = scmp.ne.s32.totalorder %s95, %s97
      %p104 = scmp.eq.s32.totalorder %s19, 1
      %p105 = por %p103, %p104
      %p106 = scmp.ne.s32.totalorder %s97, %s98
      %p107 = scmp.eq.s32.totalorder %s19, 0
      %p108 = por %p106, %p107
      %p109 = scmp.ne.s32.totalorder %s97, %s98
      %p110 = scmp.eq.s32.totalorder %s20, 1
      %p111 = por %p109, %p110
      %p113 = scmp.ne.s32.totalorder %s98, %s112
      %p114 = scmp.eq.s32.totalorder %s20, 0
      %p115 = por %p113, %p114
      %s116 = ssub.s32 %s14, %s21
      %p117 = scmp.eq.s32.totalorder %s116, 0
      %s119 = sadd.s32 %s118, 1
      %s120 = scalar_select %p117, %s118, %s119
      %p123 = pneg %p117
      %p124 = scmp.eq.s32.totalorder %s14, 1
      %p125 = por %p123, %p124
      %p126 = scmp.ne.s32.totalorder %s118, %s121
      %p127 = scmp.eq.s32.totalorder %s14, 0
      %p128 = por %p126, %p127
      %p129 = scmp.ne.s32.totalorder %s118, %s121
      %p130 = scmp.eq.s32.totalorder %s19, 1
      %p131 = por %p129, %p130
      %p132 = scmp.ne.s32.totalorder %s121, %s122
      %p133 = scmp.eq.s32.totalorder %s19, 0
      %p134 = por %p132, %p133
      %p135 = scmp.ne.s32.totalorder %s121, %s122
      %p136 = scmp.eq.s32.totalorder %s20, 1
      %p137 = por %p135, %p136
      %p139 = scmp.ne.s32.totalorder %s122, %s138
      %p140 = scmp.eq.s32.totalorder %s20, 0
      %p141 = por %p139, %p140
      %p142 = scmp.le.s32.totalorder 1, %s14
      %p143 = scmp.lt.s32.totalorder %s14, 3
      %p144 = pnand %p142, %p143
      %p145 = pneg %p144
      // Predicated region
      $region9: #{tpu_custom_call.1} parent=5 // pred_check
        _
      $region10: #{tpu_custom_call.1} parent=5 // pred_check_branch
        %147 = sbr.rel (%p144) target = $region12
      $region11: #{tpu_custom_call.1} parent=5 // pred_region
        %s148 = ssub.s32 %s14, 1
        // Predicated region
        $region13: #{tpu_custom_call.1} parent=11 // pred_check
          %p149 = pneg %p87
        $region14: #{tpu_custom_call.1} parent=11 // pred_check_branch
          %151 = sbr.rel (%p149) target = $region16
        $region15: #{tpu_custom_call.1} parent=11 // pred_region
          _
        $region16: #{tpu_custom_call.1} parent=11 // pred_fallthru
          _
        // Predicated region
        $region17: #{tpu_custom_call.1} parent=11 // pred_check
          %p152 = pneg %p108
        $region18: #{tpu_custom_call.1} parent=11 // pred_check_branch
          %154 = sbr.rel (%p152) target = $region20
        $region19: #{tpu_custom_call.1} parent=11 // pred_region
          %156 = vsyncadd [#allocation3], 0
          %s157 = sshll.u32 %s3, 4
          %s158 = int_to_ptr.hbm [resolvable:$true] %s157
          %s159 = sshll.u32 [#allocation2], 4
          %s160 = int_to_ptr.vmem [resolvable:$true] %s159
          %165 = dma.hbm_to_vmem [thread:$0]  %s158, 1024, %s160, [#allocation3], 64, 64, 4
        $region20: #{tpu_custom_call.1} parent=11 // pred_fallthru
          _
      $region12: #{tpu_custom_call.1} parent=5 // pred_fallthru
        _
      %p166 = scmp.lt.s32.totalorder %s14, 2
      // Predicated region
      $region21: #{tpu_custom_call.1} parent=5 // pred_check
        %p167 = pneg %p166
      $region22: #{tpu_custom_call.1} parent=5 // pred_check_branch
        %169 = sbr.rel (%p167) target = $region24
      $region23: #{tpu_custom_call.1} parent=5 // pred_region
        // Predicated region
        $region25: #{tpu_custom_call.1} parent=23 // pred_check
          %p170 = pneg %p34
        $region26: #{tpu_custom_call.1} parent=23 // pred_check_branch
          %172 = sbr.rel (%p170) target = $region28
        $region27: #{tpu_custom_call.1} parent=23 // pred_region
          %p173 = scmp.lt.s32.totalorder %s14, 1
          %s174 = scalar_select %p173, %s14, 1
          %s175 = smul.addr %s174, 8
          %s176 = scalar_lea.vmem %s0, %s175
        $region28: #{tpu_custom_call.1} parent=23 // pred_fallthru
          _
        // Predicated region
        $region29: #{tpu_custom_call.1} parent=23 // pred_check
          %p177 = pneg %p60
        $region30: #{tpu_custom_call.1} parent=23 // pred_check_branch
          %179 = sbr.rel (%p177) target = $region32
        $region31: #{tpu_custom_call.1} parent=23 // pred_region
          %p180 = scmp.lt.s32.totalorder %s14, 1
          %s181 = scalar_select %p180, %s14, 1
          %s182 = smul.addr %s181, 8
          %s183 = scalar_lea.vmem %s1, %s182
        $region32: #{tpu_custom_call.1} parent=23 // pred_fallthru
          _
      $region24: #{tpu_custom_call.1} parent=5 // pred_fallthru
        _
      %p184 = scmp.le.s32.totalorder 1, %s14
      %p185 = scmp.lt.s32.totalorder %s14, 3
      %p186 = pnand %p184, %p185
      %p187 = pneg %p186
      // Predicated region
      $region33: #{tpu_custom_call.1} parent=5 // pred_check
        _
      $region34: #{tpu_custom_call.1} parent=5 // pred_check_branch
        %189 = sbr.rel (%p186) target = $region36
      $region35: #{tpu_custom_call.1} parent=5 // pred_region
        %s190 = ssub.s32 %s14, 1
        // Predicated region
        $region37: #{tpu_custom_call.1} parent=35 // pred_check
          %p191 = pneg %p108
        $region38: #{tpu_custom_call.1} parent=35 // pred_check_branch
          %193 = sbr.rel (%p191) target = $region40
        $region39: #{tpu_custom_call.1} parent=35 // pred_region
          %195 = dma.done [#allocation3], 1024
        $region40: #{tpu_custom_call.1} parent=35 // pred_fallthru
          _
        %p196 = scmp.lt.s32.totalorder %s19, 1
        %s197 = scalar_select %p196, %s19, 1
        %s198 = smul.addr %s197, 8
        %s199 = scalar_lea.vmem %s0, %s198
        %p200 = pneg %p40
        %p201 = pneg %p37
        %p202 = scmp.lt.s32.totalorder %s19, 1
        %s203 = scalar_select %p202, %s19, 1
        %s204 = smul.addr %s203, 8
        %s205 = scalar_lea.vmem %s1, %s204
        %p206 = pneg %p66
        %p207 = pneg %p63
        %p208 = pneg %p87
        %p209 = pneg %p84
        %p210 = pneg %p108
        %p211 = pneg %p105
        %p212 = pneg %p134
        %p213 = pneg %p131
        %s214 = sand.u32 %s121, 1
        %s215 = scalar_lea.sflag [#allocation4], %s214
        %s216 = sand.u32 %s121, 1
        %s217 = smul.addr %s216, 8
        %s218 = scalar_lea.vmem [#allocation5], %s217
        %p219 = scmp.lt.s32.totalorder %s19, 1
        %s220 = scalar_select %p219, %s19, 1
        %s221 = smul.addr %s220, 8
        %s222 = scalar_lea.vmem %s0, %s221
        %p223 = scmp.lt.s32.totalorder %s19, 1
        %s224 = scalar_select %p223, %s19, 1
        %s225 = smul.addr %s224, 8
        %s226 = scalar_lea.vmem %s1, %s225
        %v227 = vld [vmem:[%s222] sm:$0xff]
        %v228 = vlaneseq
        %v229 = vand.u32 %v228, 127
        %230 = vset.pattern.permute.xlu0 0
        %231 = vperm.xlu0 %230, %v227
        %v232 = vpop.permute.xlu0 %231
        %vm233 = vcmp.eq.s32.totalorder %v232, %v229
        %v234 = vsel %vm233, 1, 0
        %v235 = vcvt.s32.f32 %v234
        %v236 = vpack.c.bf16 %v235, %v235
        %v237 = vld [vmem:[#allocation2] sm:$0xf]
        %v238 = vld [vmem:[#allocation2 + $0x4] sm:$0xf]
        %v239 = vld [vmem:[#allocation2 + $0x8] sm:$0xf]
        %v240 = vld [vmem:[#allocation2 + $0xc] sm:$0xf]
        %v241 = vld [vmem:[#allocation2 + $0x10] sm:$0xf]
        %v242 = vld [vmem:[#allocation2 + $0x14] sm:$0xf]
        %v243 = vld [vmem:[#allocation2 + $0x18] sm:$0xf]
        %v244 = vld [vmem:[#allocation2 + $0x1c] sm:$0xf]
        %v245 = vld [vmem:[#allocation2 + $0x20] sm:$0xf]
        %v246 = vld [vmem:[#allocation2 + $0x24] sm:$0xf]
        %v247 = vld [vmem:[#allocation2 + $0x28] sm:$0xf]
        %v248 = vld [vmem:[#allocation2 + $0x2c] sm:$0xf]
        %v249 = vld [vmem:[#allocation2 + $0x30] sm:$0xf]
        %v250 = vld [vmem:[#allocation2 + $0x34] sm:$0xf]
        %v251 = vld [vmem:[#allocation2 + $0x38] sm:$0xf]
        %v252 = vld [vmem:[#allocation2 + $0x3c] sm:$0xf]
        %v269 = vunpack.c.l.b16 %v237
        %v270 = vunpack.c.l.b16 %v238
        %v271 = vunpack.c.l.b16 %v239
        %v272 = vunpack.c.l.b16 %v240
        %v273 = vunpack.c.l.b16 %v241
        %v274 = vunpack.c.l.b16 %v242
        %v275 = vunpack.c.l.b16 %v243
        %v276 = vunpack.c.l.b16 %v244
        %v277 = vunpack.c.l.b16 %v245
        %v278 = vunpack.c.l.b16 %v246
        %v279 = vunpack.c.l.b16 %v247
        %v280 = vunpack.c.l.b16 %v248
        %v281 = vunpack.c.l.b16 %v249
        %v282 = vunpack.c.l.b16 %v250
        %v283 = vunpack.c.l.b16 %v251
        %v284 = vunpack.c.l.b16 %v252
        %v285 = vpack.c.b16 %v270, %v269
        %v286 = vpack.c.b16 %v272, %v271
        %v287 = vpack.c.b16 %v274, %v273
        %v288 = vpack.c.b16 %v276, %v275
        %v289 = vpack.c.b16 %v278, %v277
        %v290 = vpack.c.b16 %v280, %v279
        %v291 = vpack.c.b16 %v282, %v281
        %v292 = vpack.c.b16 %v284, %v283
        %301 = vmatpush.bf16.msra.mxu0 %v292
        %302 = vmatpush.bf16.msra.mxu0 %v291
        %303 = vmatpush.bf16.msra.mxu0 %v290
        %304 = vmatpush.bf16.msra.mxu0 %v289
        %305 = vmatpush.bf16.msra.mxu0 %v288
        %306 = vmatpush.bf16.msra.mxu0 %v287
        %307 = vmatpush.bf16.msra.mxu0 %v286
        %308 = vmatpush.bf16.msra.mxu0 %v285
        %309 = vmatmul.bf16.gmra.mxu0 %v236
        %v310 = vpop.f32.mrf.mxu0
        %v311 = vadd.f32 0.0, %v310
        %v312 = vpop.f32.mrf.mxu0
        %313 = vdwg.mxu0
        %v314 = vld [vmem:[%s2] sm:$0xff]
        %v315 = vmul.f32 %v311, 11.313708
        %v316 = vadd.f32 %v315, %v314
        %v317 = vld [vmem:[%s226] sm:$0xff]
        %319 = vset.pattern.permute.xlu0 0
        %320 = vperm.xlu0 %319, %v317
        %v321 = vpop.permute.xlu0 %320
        %v323 = vmul.f32 %v316, %v321
        %324 = vst [vmem:[%s218] sm:$0xff] %v323
        %s325 = sand.u32 %s121, 1
        %s326 = scalar_lea.sflag [#allocation4], %s325
        %s327 = sand.u32 %s121, 1
        %s328 = smul.addr %s327, 8
        %s329 = scalar_lea.vmem [#allocation5], %s328
        // Predicated region
        $region41: #{tpu_custom_call.1} parent=35 // pred_check
          %p330 = pneg %p131
        $region42: #{tpu_custom_call.1} parent=35 // pred_check_branch
          %332 = sbr.rel (%p330) target = $region44
        $region43: #{tpu_custom_call.1} parent=35 // pred_region
          %334 = vsyncadd %s326, 0
          %s335 = smul.addr %s19, 8
          %s336 = scalar_lea.hbm %s4, %s335
          %s338 = sshll.u32 %s329, 4
          %s339 = int_to_ptr.vmem [resolvable:$true] %s338
          %s340 = sshll.u32 %s336, 4
          %s341 = int_to_ptr.hbm [resolvable:$true] %s340
          %343 = dma.vmem_to_hbm [thread:$0]  %s339, 128, %s341, %s326
        $region44: #{tpu_custom_call.1} parent=35 // pred_fallthru
          _
      $region36: #{tpu_custom_call.1} parent=5 // pred_fallthru
        _
      %p344 = scmp.le.s32.totalorder 2, %s14
      // Predicated region
      $region45: #{tpu_custom_call.1} parent=5 // pred_check
        %p345 = pneg %p344
      $region46: #{tpu_custom_call.1} parent=5 // pred_check_branch
        %347 = sbr.rel (%p345) target = $region48
      $region47: #{tpu_custom_call.1} parent=5 // pred_region
        %s348 = ssub.s32 %s14, 2
        // Predicated region
        $region49: #{tpu_custom_call.1} parent=47 // pred_check
          %p349 = pneg %p137
        $region50: #{tpu_custom_call.1} parent=47 // pred_check_branch
          %351 = sbr.rel (%p349) target = $region52
        $region51: #{tpu_custom_call.1} parent=47 // pred_region
          %s352 = sand.u32 %s122, 1
          %s353 = scalar_lea.sflag [#allocation4], %s352
          %s354 = sand.u32 %s122, 1
          %s355 = smul.addr %s354, 8
          %s356 = scalar_lea.vmem [#allocation5], %s355
          %358 = dma.done %s353, 128
        $region52: #{tpu_custom_call.1} parent=47 // pred_fallthru
          _
      $region48: #{tpu_custom_call.1} parent=5 // pred_fallthru
        _
    $region6: #{tpu_custom_call.1} parent=1 // loop_footer
      %s18 = sadd.s32 1, %s14
    $region7: #{tpu_custom_call.1} parent=1 // loop_footer_branch
      %13 = sbr.rel target = $region3
    $region8: #{tpu_custom_call.1} parent=1 // loop_exit
      _
    %359 = vsyncpa [#allocation3], 1
    %s360 = scalar_lea.sflag [#allocation3], 1
    %361 = vsyncpa %s360, 1
    %362 = vsyncpa [#allocation4], 1
    %s363 = scalar_lea.sflag [#allocation4], 1
    %364 = vsyncpa %s363, 1

</llo_original>
